<compile_context>
chip_gen: v6e
topology: v6e:2x2x1
jax: 0.10.0
libtpu: 0.0.40
codegen_flags: <defaults>
</compile_context>

<pallas_src>
import functools

import jax
import jax.numpy as jnp
from jax.experimental import pallas as pl
from jax.experimental.pallas import tpu as pltpu


def _round_up(x: int, m: int) -> int:
    return (x + m - 1) // m * m


# ---------------------------------------------------------------------------
# Fused kernel: delta_w into VMEM scratch once per group, then
# (x_tile @ delta_w) @ B^T for each row tile.
# ---------------------------------------------------------------------------
def _neat_fused_kernel(x_ref, w_ref, at_ref, bt_ref, o_ref, dw_ref):
    # delta_w = relu(weight @ A^T): computed at the first inner-axis step of
    # each group.  Inner axis is "arbitrary" (sequential on one core) so the
    # scratch persists across the row tiles of the group.
    @pl.when(pl.program_id(1) == 0)
    def _():
        dw = jnp.dot(w_ref[...], at_ref[...], preferred_element_type=jnp.float32)
        dw_ref[...] = jnp.maximum(dw, 0.0).astype(dw_ref.dtype)

    # h = x_tile @ delta_w   (f32 accumulation on the MXU)
    h = jnp.dot(x_ref[...], dw_ref[...], preferred_element_type=jnp.float32)
    # out = h @ B^T
    out = jnp.dot(h.astype(bt_ref.dtype), bt_ref[...],
                  preferred_element_type=jnp.float32)
    o_ref[...] = out.astype(o_ref.dtype)


def _neat_pallas(x2d, weight, a_t, b_t, *, tm, n_groups, tiles_per_group,
                 compute_dtype):
    m_pad, d_out = x2d.shape
    dim = a_t.shape[1]
    tpg = tiles_per_group

    itemsize = jnp.dtype(compute_dtype).itemsize
    flops = (n_groups * 2 * d_out * d_out * dim          # delta_w (per group)
             + 4 * m_pad * d_out * dim)                  # x@dw and h@B^T
    bytes_accessed = (
        (m_pad * d_out + d_out * d_out + 2 * d_out * dim) * itemsize
        + m_pad * d_out * 4                              # f32 output
    )

    return pl.pallas_call(
        _neat_fused_kernel,
        out_shape=jax.ShapeDtypeStruct((m_pad, d_out), jnp.float32),
        grid_spec=pltpu.PrefetchScalarGridSpec(
            num_scalar_prefetch=0,
            grid=(n_groups, tpg),
            in_specs=[
                pl.BlockSpec((tm, d_out), lambda g, t: (g * tpg + t, 0)),   # x tile
                pl.BlockSpec((d_out, d_out), lambda g, t: (0, 0)),          # weight (invariant)
                pl.BlockSpec((d_out, dim), lambda g, t: (0, 0)),            # A^T    (invariant)
                pl.BlockSpec((dim, d_out), lambda g, t: (0, 0)),            # B^T    (invariant)
            ],
            out_specs=pl.BlockSpec((tm, d_out), lambda g, t: (g * tpg + t, 0)),
            scratch_shapes=[pltpu.VMEM((d_out, dim), compute_dtype)],
        ),
        compiler_params=pltpu.CompilerParams(
            # Leading "parallel" group axis -> megacore split on v7x;
            # inner "arbitrary" axis -> scratch delta_w carried across tiles.
            dimension_semantics=("parallel", "arbitrary"),
        ),
        cost_estimate=pl.CostEstimate(
            flops=flops, transcendentals=0, bytes_accessed=bytes_accessed
        ),
    )(x2d, weight, a_t, b_t)


# ---------------------------------------------------------------------------
# Wrapper matching neat_vanilla.forward(x, weight)
# ---------------------------------------------------------------------------
@functools.partial(jax.jit, static_argnames=("compute_dtype", "tm_max"))
def neat_vanilla_forward(x, weight, a_weight, b_weight, *,
                         compute_dtype=jnp.float32, tm_max=256):
    """
    x        : (batch, seq, D_out)
    weight   : (D_out, D_out)   frozen base weight passed to forward
    a_weight : (dim, D_out)     == self.A.weight
    b_weight : (D_out, dim)     == self.B.weight (zero-init in the module)
    compute_dtype: jnp.float32 or jnp.bfloat16 (bf16 MXU path for v6e/v7x)
    """
    orig_dtype = x.dtype
    batch, seq, d_out = x.shape
    m = batch * seq

    cd = jnp.dtype(compute_dtype)
    x2d = x.reshape(m, d_out).astype(cd)
    w = weight.astype(cd)
    a_t = a_weight.T.astype(cd)            # (D_out, dim)
    b_t = b_weight.T.astype(cd)            # (dim, D_out)

    # Row tile: as large as useful (<= tm_max), multiple of 8.
    tm = min(_round_up(tm_max, 8), _round_up(m, 8))
    n_tiles = -(-m // tm)  # cdiv
    # Two groups (leading parallel axis) whenever there are >= 2 row tiles so
    # v7x can split row tiles across its two TensorCores.  Single-core chips
    # just pay one extra delta_w matmul per kernel invocation.
    n_groups = 2 if n_tiles >= 2 else 1
    tiles_per_group = _round_up(n_tiles, n_groups) // n_groups
    m_pad = n_groups * tiles_per_group * tm
    if m_pad != m:
        x2d = jnp.pad(x2d, ((0, m_pad - m), (0, 0)))

    out2d = _neat_pallas(x2d, w, a_t, b_t, tm=tm, n_groups=n_groups,
                         tiles_per_group=tiles_per_group, compute_dtype=cd)
    return out2d[:m].reshape(batch, seq, d_out).astype(orig_dtype)


# Pure-JAX reference for correctness checking.
def neat_vanilla_ref(x, weight, a_weight, b_weight):
    delta_w = jax.nn.relu(weight @ a_weight.T)
    h = x @ delta_w
    return h @ b_weight.T


if __name__ == "__main__":
    # Small, TPU-friendly shapes consistent with the module's semantics.
    batch, seq = 2, 8
    dim, out_dim = 32, 256

    key = jax.random.PRNGKey(0)
    kx, kw, ka, kb, kx2 = jax.random.split(key, 5)

    x = jax.random.normal(kx, (batch, seq, out_dim), dtype=jnp.float32)
    weight = jax.random.normal(kw, (out_dim, out_dim), dtype=jnp.float32) * 0.02

    bound = 1.0 / (out_dim ** 0.5)
    a_weight = jax.random.uniform(
        ka, (dim, out_dim), dtype=jnp.float32, minval=-bound, maxval=bound
    )
    # The module zero-inits B (output would be trivially zero); use a random B
    # here so the correctness checks actually exercise the second matmul.
    b_bound = 1.0 / (dim ** 0.5)
    b_weight = jax.random.uniform(
        kb, (out_dim, dim), dtype=jnp.float32, minval=-b_bound, maxval=b_bound
    )

    ref = neat_vanilla_ref(x, weight, a_weight, b_weight)

    # 1) f32 path, big tile -> grid (1,1): strict check.
    out_f32 = jax.block_until_ready(
        neat_vanilla_forward(x, weight, a_weight, b_weight,
                             compute_dtype=jnp.float32, tm_max=256))
    assert out_f32.shape == (batch, seq, out_dim)
    assert jnp.allclose(out_f32, ref, atol=1e-4, rtol=1e-4), "f32 mismatch vs reference"

    # 2) tiny tiles -> grid (2,1): exercises per-group delta_w init / the
    #    megacore-style split, still f32-strict.
    out_g2 = jax.block_until_ready(
        neat_vanilla_forward(x, weight, a_weight, b_weight,
                             compute_dtype=jnp.float32, tm_max=8))
    assert jnp.allclose(out_g2, ref, atol=1e-4, rtol=1e-4), "grouped f32 mismatch"

    # 3) larger M -> grid (2,2): exercises the scratch carry across the inner
    #    "arbitrary" axis; bf16 MXU path with a looser tolerance.
    x2 = jax.random.normal(kx2, (batch, 2 * seq, out_dim), dtype=jnp.float32)
    ref2 = neat_vanilla_ref(x2, weight, a_weight, b_weight)
    out_bf16 = jax.block_until_ready(
        neat_vanilla_forward(x2, weight, a_weight, b_weight,
                             compute_dtype=jnp.bfloat16, tm_max=8))
    assert jnp.allclose(out_bf16, ref2, atol=3e-2, rtol=3e-2), "bf16 mismatch vs reference"

    # 4) zero-init B (faithful to __init__): output must be exactly zero.
    out_zero = jax.block_until_ready(
        neat_vanilla_forward(x, weight, a_weight,
                             jnp.zeros((out_dim, dim), jnp.float32)))
    assert jnp.allclose(out_zero, jnp.zeros_like(out_zero)), "zero-B output not zero"

    print("KERNEL_OK")
</pallas_src>

<mosaic_0001>
module attributes {stable_mosaic.version = 11 : i64} {
  func.func @_neat_fused_kernel(%arg0: i32, %arg1: i32, %arg2: memref<16x256xf32, #tpu.memory_space<vmem>>, %arg3: memref<256x256xf32, #tpu.memory_space<vmem>>, %arg4: memref<256x32xf32, #tpu.memory_space<vmem>>, %arg5: memref<32x256xf32, #tpu.memory_space<vmem>>, %arg6: memref<16x256xf32, #tpu.memory_space<vmem>>, %arg7: memref<256x32xf32, #tpu.memory_space<vmem>>) attributes {dimension_semantics = [#tpu.dimension_semantics<parallel>, #tpu.dimension_semantics<arbitrary>], iteration_bounds = array<i64: 1, 1>, scalar_prefetch = 0 : i64, scratch_operands = 1 : i64, tpu.core_type = #tpu.core_type<tc>, window_params = [{transform_indices = @transform_0, window_bounds = array<i64: 16, 256>}, {pipeline_mode = #tpu.pipeline_mode<synchronous>, transform_indices = @transform_1, window_bounds = array<i64: 256, 256>}, {pipeline_mode = #tpu.pipeline_mode<synchronous>, transform_indices = @transform_2, window_bounds = array<i64: 256, 32>}, {pipeline_mode = #tpu.pipeline_mode<synchronous>, transform_indices = @transform_3, window_bounds = array<i64: 32, 256>}, {transform_indices = @transform_4, window_bounds = array<i64: 16, 256>}]} {
    %c0_i32 = arith.constant 0 : i32
    %0 = arith.cmpi eq, %arg1, %c0_i32 : i32
    %1 = arith.extui %0 : i1 to i32
    %c0_i32_0 = arith.constant 0 : i32
    %2 = arith.cmpi ne, %1, %c0_i32_0 : i32
    scf.if %2 {
      %c0_9 = arith.constant 0 : index
      %c0_10 = arith.constant 0 : index
      %9 = vector.load %arg3[%c0_9, %c0_10] : memref<256x256xf32, #tpu.memory_space<vmem>>, vector<256x256xf32>
      %c0_11 = arith.constant 0 : index
      %c0_12 = arith.constant 0 : index
      %10 = vector.load %arg4[%c0_11, %c0_12] : memref<256x32xf32, #tpu.memory_space<vmem>>, vector<256x32xf32>
      %cst_13 = arith.constant dense<0.000000e+00> : vector<256x32xf32>
      %11 = tpu.matmul %9, %10, %cst_13 {dimension_numbers = #tpu.dot_dimension_numbers<[1], [0], [0], [1], [0, 0, 1, 1], [], []>} : vector<256x256xf32>, vector<256x32xf32>, vector<256x32xf32> -> vector<256x32xf32>
      %cst_14 = arith.constant 0.000000e+00 : f32
      %12 = vector.broadcast %cst_14 : f32 to vector<256x32xf32>
      %13 = arith.maximumf %11, %12 : vector<256x32xf32>
      %c0_15 = arith.constant 0 : index
      %c0_16 = arith.constant 0 : index
      %14 = vector.load %arg7[%c0_15, %c0_16] : memref<256x32xf32, #tpu.memory_space<vmem>>, vector<256x32xf32>
      tpu.vector_store %arg7[%c0_15, %c0_16], %13 {strides = array<i32>} : memref<256x32xf32, #tpu.memory_space<vmem>>, vector<256x32xf32>,
    } else {
    }
    %c0 = arith.constant 0 : index
    %c0_1 = arith.constant 0 : index
    %3 = vector.load %arg2[%c0, %c0_1] : memref<16x256xf32, #tpu.memory_space<vmem>>, vector<16x256xf32>
    %c0_2 = arith.constant 0 : index
    %c0_3 = arith.constant 0 : index
    %4 = vector.load %arg7[%c0_2, %c0_3] : memref<256x32xf32, #tpu.memory_space<vmem>>, vector<256x32xf32>
    %cst = arith.constant dense<0.000000e+00> : vector<16x32xf32>
    %5 = tpu.matmul %3, %4, %cst {dimension_numbers = #tpu.dot_dimension_numbers<[1], [0], [0], [1], [0, 0, 1, 1], [], []>} : vector<16x256xf32>, vector<256x32xf32>, vector<16x32xf32> -> vector<16x32xf32>
    %c0_4 = arith.constant 0 : index
    %c0_5 = arith.constant 0 : index
    %6 = vector.load %arg5[%c0_4, %c0_5] : memref<32x256xf32, #tpu.memory_space<vmem>>, vector<32x256xf32>
    %cst_6 = arith.constant dense<0.000000e+00> : vector<16x256xf32>
    %7 = tpu.matmul %5, %6, %cst_6 {dimension_numbers = #tpu.dot_dimension_numbers<[1], [0], [0], [1], [0, 0, 1, 1], [], []>} : vector<16x32xf32>, vector<32x256xf32>, vector<16x256xf32> -> vector<16x256xf32>
    %c0_7 = arith.constant 0 : index
    %c0_8 = arith.constant 0 : index
    %8 = vector.load %arg6[%c0_7, %c0_8] : memref<16x256xf32, #tpu.memory_space<vmem>>, vector<16x256xf32>
    tpu.vector_store %arg6[%c0_7, %c0_8], %7 {strides = array<i32>} : memref<16x256xf32, #tpu.memory_space<vmem>>, vector<16x256xf32>,
    return
  }
  func.func @transform_0(%arg0: i32, %arg1: i32) -> (i32, i32) {
    %c1_i32 = arith.constant 1 : i32
    %0 = arith.muli %arg0, %c1_i32 : i32
    %1 = arith.addi %0, %arg1 : i32
    %c0_i32 = arith.constant 0 : i32
    %c0_i32_0 = arith.constant 0 : i32
    return %1, %c0_i32 : i32, i32
  }
  func.func @transform_1(%arg0: i32, %arg1: i32) -> (i32, i32) {
    %c0_i32 = arith.constant 0 : i32
    %c0_i32_0 = arith.constant 0 : i32
    %c0_i32_1 = arith.constant 0 : i32
    return %c0_i32, %c0_i32_0 : i32, i32
  }
  func.func @transform_2(%arg0: i32, %arg1: i32) -> (i32, i32) {
    %c0_i32 = arith.constant 0 : i32
    %c0_i32_0 = arith.constant 0 : i32
    %c0_i32_1 = arith.constant 0 : i32
    return %c0_i32, %c0_i32_0 : i32, i32
  }
  func.func @transform_3(%arg0: i32, %arg1: i32) -> (i32, i32) {
    %c0_i32 = arith.constant 0 : i32
    %c0_i32_0 = arith.constant 0 : i32
    %c0_i32_1 = arith.constant 0 : i32
    return %c0_i32, %c0_i32_0 : i32, i32
  }
  func.func @transform_4(%arg0: i32, %arg1: i32) -> (i32, i32) {
    %c1_i32 = arith.constant 1 : i32
    %0 = arith.muli %arg0, %c1_i32 : i32
    %1 = arith.addi %0, %arg1 : i32
    %c0_i32 = arith.constant 0 : i32
    %c0_i32_0 = arith.constant 0 : i32
    return %1, %c0_i32 : i32, i32
  }
}

</mosaic_0001>

<llo_original>
// kernel: neat_vanilla_forward.1
$region0: #{neat_vanilla_forward.1}
  #allocation0 [shape = 'u32[]', space=smem, size = 0x4, offset = 0x4, fixed_abs, tag = 'smem constant byte address 0x4 - core index']
  #allocation1 [shape = 'u32[144,128]{1,0:T(1,128)}', space=vmem, size = 0x12000, scoped, tag = 'internal scratch']
  #allocation2 [shape = 'f32[256,32]{1,0:T(8,128)}', space=vmem, size = 0x20000, scoped, tag = 'scratch operand']
  %s0 = inlined_call_operand.vmem [shape: f32[16,256], index: 0, kind: input, shape index: {}]
  %s1 = inlined_call_operand.hbm [shape: f32[256,256], index: 1, kind: input, shape index: {}]
  %s2 = inlined_call_operand.vmem [shape: f32[256,32], index: 2, kind: input, shape index: {}]
  %s3 = inlined_call_operand.vmem [shape: f32[32,256], index: 3, kind: input, shape index: {}]
  %s4 = inlined_call_operand.hbm [shape: f32[16,256], index: 4, kind: output, shape index: {}]
  %s5 = sld [smem:[#allocation0]]
  $region34: #{neat_vanilla_forward.1} parent=0
    _
  %s7 = ssub.s32 1, %s5
  %s8 = scalar_select 0, %s7, %s5
  $region1: #{neat_vanilla_forward.1} parent=0
    #allocation3 [shape = 'u8[262144]{0}', space=vmem, size = 0x40000, scoped, tag = 'input window, operand 1, single buffered']
    #allocation4 [shape = 's32[1]{0}', space=sflag, size = 0x4, scoped, tag = 'scoped memory for neat_vanilla_forward.1']
    #allocation5 [shape = 's32[1]{0}', space=sflag, size = 0x4, scoped, tag = 'scoped memory for neat_vanilla_forward.1']
    #allocation6 [shape = 'u8[16384]{0}', space=vmem, size = 0x4000, scoped, tag = 'output window, operand 0, single buffered']
    %9 = vsyncpa [#allocation4], 0
    %10 = vsyncpa [#allocation5], 0
    // Predicated region
    $region2: #{neat_vanilla_forward.1} parent=1 // pred_check
      _
    $region3: #{neat_vanilla_forward.1} parent=1 // pred_check_branch
      %12 = sbr.rel (0) target = $region5
    $region4: #{neat_vanilla_forward.1} parent=1 // pred_region
      %s13 = sadd.s32 0, 0
      %s14 = smul.u32 2, %s13
      %p15 = scmp.lt.s32.totalorder %s14, 1
      %s16 = scalar_select %p15, %s14, 1
      %s17 = smul.addr %s16, 2
      %s18 = smul.addr %s17, 8
      %s19 = scalar_lea.vmem %s0, %s18
      %s20 = sadd.s32 0, 0
      %s21 = smul.u32 2, %s20
    $region5: #{neat_vanilla_forward.1} parent=1 // pred_fallthru
      _
    // Predicated region
    $region6: #{neat_vanilla_forward.1} parent=1 // pred_check
      _
    $region7: #{neat_vanilla_forward.1} parent=1 // pred_check_branch
      %23 = sbr.rel (0) target = $region9
    $region8: #{neat_vanilla_forward.1} parent=1 // pred_region
      %s25 = ssub.s32 8192, 8192
      %26 = vsyncadd [#allocation4], %s25
      %s27 = sshll.u32 [#allocation3], 4
      %s28 = int_to_ptr.vmem [resolvable:$true] %s27
      %33 = dma.hbm_to_vmem [thread:$0]  %s1, 8192, %s28, [#allocation4], 256, 256, 16
    $region9: #{neat_vanilla_forward.1} parent=1 // pred_fallthru
      _
    // Predicated region
    $region10: #{neat_vanilla_forward.1} parent=1 // pred_check
      _
    $region11: #{neat_vanilla_forward.1} parent=1 // pred_check_branch
      %35 = sbr.rel (0) target = $region13
    $region12: #{neat_vanilla_forward.1} parent=1 // pred_region
      _
    $region13: #{neat_vanilla_forward.1} parent=1 // pred_fallthru
      _
    // Predicated region
    $region14: #{neat_vanilla_forward.1} parent=1 // pred_check
      _
    $region15: #{neat_vanilla_forward.1} parent=1 // pred_check_branch
      %37 = sbr.rel (0) target = $region17
    $region16: #{neat_vanilla_forward.1} parent=1 // pred_region
      _
    $region17: #{neat_vanilla_forward.1} parent=1 // pred_fallthru
      _
    // Predicated region
    $region18: #{neat_vanilla_forward.1} parent=1 // pred_check
      _
    $region19: #{neat_vanilla_forward.1} parent=1 // pred_check_branch
      %39 = sbr.rel (0) target = $region21
    $region20: #{neat_vanilla_forward.1} parent=1 // pred_region
      %40 = dma.done [#allocation4], 8192
    $region21: #{neat_vanilla_forward.1} parent=1 // pred_fallthru
      _
    %s41 = sadd.s32 0, 0
    %s42 = smul.u32 2, %s41
    %p43 = scmp.lt.s32.totalorder %s42, 1
    %s44 = scalar_select %p43, %s42, 1
    %s45 = smul.addr %s44, 2
    %s46 = smul.addr %s45, 8
    %s47 = scalar_lea.vmem %s0, %s46
    %s48 = sadd.s32 0, 0
    %s49 = smul.u32 2, %s48
    %p50 = scmp.lt.s32.totalorder %s49, 1
    %s51 = scalar_select %p50, %s49, 1
    %s52 = smul.addr %s51, 2
    %s53 = smul.addr %s52, 8
    %s54 = scalar_lea.vmem %s0, %s53
    %s55 = sadd.s32 0, 0
    %s56 = smul.u32 2, %s55
    %s57 = sadd.s32 0, 0
    %s58 = smul.u32 2, %s57
    %p59 = scmp.eq.s32.totalorder 0, 0
    // Predicated region
    $region22: #{neat_vanilla_forward.1} parent=1 // pred_check
      %p60 = pneg %p59
    $region23: #{neat_vanilla_forward.1} parent=1 // pred_check_branch
      %62 = sbr.rel (%p60) target = $region25
    $region24: #{neat_vanilla_forward.1} parent=1 // pred_region
      %v63 = vld [vmem:[#allocation3] sm:$0xff]
      %v64 = vld [vmem:[#allocation3 + $0x8] sm:$0xff]
      %v65 = vld [vmem:[#allocation3 + $0x10] sm:$0xff]
      %v66 = vld [vmem:[#allocation3 + $0x18] sm:$0xff]
      %v67 = vld [vmem:[#allocation3 + $0x20] sm:$0xff]
      %v68 = vld [vmem:[#allocation3 + $0x28] sm:$0xff]
      %v69 = vld [vmem:[#allocation3 + $0x30] sm:$0xff]
      %v70 = vld [vmem:[#allocation3 + $0x38] sm:$0xff]
      %v71 = vld [vmem:[#allocation3 + $0x40] sm:$0xff]
      %v72 = vld [vmem:[#allocation3 + $0x48] sm:$0xff]
      %v73 = vld [vmem:[#allocation3 + $0x50] sm:$0xff]
      %v74 = vld [vmem:[#allocation3 + $0x58] sm:$0xff]
      %v75 = vld [vmem:[#allocation3 + $0x60] sm:$0xff]
      %v76 = vld [vmem:[#allocation3 + $0x68] sm:$0xff]
      %v77 = vld [vmem:[#allocation3 + $0x70] sm:$0xff]
      %v78 = vld [vmem:[#allocation3 + $0x78] sm:$0xff]
      %v79 = vld [vmem:[#allocation3 + $0x80] sm:$0xff]
      %v80 = vld [vmem:[#allocation3 + $0x88] sm:$0xff]
      %v81 = vld [vmem:[#allocation3 + $0x90] sm:$0xff]
      %v82 = vld [vmem:[#allocation3 + $0x98] sm:$0xff]
      %v83 = vld [vmem:[#allocation3 + $0xa0] sm:$0xff]
      %v84 = vld [vmem:[#allocation3 + $0xa8] sm:$0xff]
      %v85 = vld [vmem:[#allocation3 + $0xb0] sm:$0xff]
      %v86 = vld [vmem:[#allocation3 + $0xb8] sm:$0xff]
      %v87 = vld [vmem:[#allocation3 + $0xc0] sm:$0xff]
      %v88 = vld [vmem:[#allocation3 + $0xc8] sm:$0xff]
      %v89 = vld [vmem:[#allocation3 + $0xd0] sm:$0xff]
      %v90 = vld [vmem:[#allocation3 + $0xd8] sm:$0xff]
      %v91 = vld [vmem:[#allocation3 + $0xe0] sm:$0xff]
      %v92 = vld [vmem:[#allocation3 + $0xe8] sm:$0xff]
      %v93 = vld [vmem:[#allocation3 + $0xf0] sm:$0xff]
      %v94 = vld [vmem:[#allocation3 + $0xf8] sm:$0xff]
      %v95 = vld [vmem:[#allocation3 + $0x100] sm:$0xff]
      %v96 = vld [vmem:[#allocation3 + $0x108] sm:$0xff]
      %v97 = vld [vmem:[#allocation3 + $0x110] sm:$0xff]
      %v98 = vld [vmem:[#allocation3 + $0x118] sm:$0xff]
      %v99 = vld [vmem:[#allocation3 + $0x120] sm:$0xff]
      %v100 = vld [vmem:[#allocation3 + $0x128] sm:$0xff]
      %v101 = vld [vmem:[#allocation3 + $0x130] sm:$0xff]
      %v102 = vld [vmem:[#allocation3 + $0x138] sm:$0xff]
      %v103 = vld [vmem:[#allocation3 + $0x140] sm:$0xff]
      %v104 = vld [vmem:[#allocation3 + $0x148] sm:$0xff]
      %v105 = vld [vmem:[#allocation3 + $0x150] sm:$0xff]
      %v106 = vld [vmem:[#allocation3 + $0x158] sm:$0xff]
      %v107 = vld [vmem:[#allocation3 + $0x160] sm:$0xff]
      %v108 = vld [vmem:[#allocation3 + $0x168] sm:$0xff]
      %v109 = vld [vmem:[#allocation3 + $0x170] sm:$0xff]
      %v110 = vld [vmem:[#allocation3 + $0x178] sm:$0xff]
      %v111 = vld [vmem:[#allocation3 + $0x180] sm:$0xff]
      %v112 = vld [vmem:[#allocation3 + $0x188] sm:$0xff]
      %v113 = vld [vmem:[#allocation3 + $0x190] sm:$0xff]
      %v114 = vld [vmem:[#allocation3 + $0x198] sm:$0xff]
      %v115 = vld [vmem:[#allocation3 + $0x1a0] sm:$0xff]
      %v116 = vld [vmem:[#allocation3 + $0x1a8] sm:$0xff]
      %v117 = vld [vmem:[#allocation3 + $0x1b0] sm:$0xff]
      %v118 = vld [vmem:[#allocation3 + $0x1b8] sm:$0xff]
      %v119 = vld [vmem:[#allocation3 + $0x1c0] sm:$0xff]
      %v120 = vld [vmem:[#allocation3 + $0x1c8] sm:$0xff]
      %v121 = vld [vmem:[#allocation3 + $0x1d0] sm:$0xff]
      %v122 = vld [vmem:[#allocation3 + $0x1d8] sm:$0xff]
      %v123 = vld [vmem:[#allocation3 + $0x1e0] sm:$0xff]
      %v124 = vld [vmem:[#allocation3 + $0x1e8] sm:$0xff]
      %v125 = vld [vmem:[#allocation3 + $0x1f0] sm:$0xff]
      %v126 = vld [vmem:[#allocation3 + $0x1f8] sm:$0xff]
      %v127 = vld [vmem:[%s2] sm:$0xff]
      %v128 = vld [vmem:[%s2 + $0x8] sm:$0xff]
      %v129 = vld [vmem:[%s2 + $0x10] sm:$0xff]
      %v130 = vld [vmem:[%s2 + $0x18] sm:$0xff]
      %v131 = vld [vmem:[%s2 + $0x20] sm:$0xff]
      %v132 = vld [vmem:[%s2 + $0x28] sm:$0xff]
      %v133 = vld [vmem:[%s2 + $0x30] sm:$0xff]
      %v134 = vld [vmem:[%s2 + $0x38] sm:$0xff]
      %v135 = vld [vmem:[%s2 + $0x40] sm:$0xff]
      %v136 = vld [vmem:[%s2 + $0x48] sm:$0xff]
      %v137 = vld [vmem:[%s2 + $0x50] sm:$0xff]
      %v138 = vld [vmem:[%s2 + $0x58] sm:$0xff]
      %v139 = vld [vmem:[%s2 + $0x60] sm:$0xff]
      %v140 = vld [vmem:[%s2 + $0x68] sm:$0xff]
      %v141 = vld [vmem:[%s2 + $0x70] sm:$0xff]
      %v142 = vld [vmem:[%s2 + $0x78] sm:$0xff]
      %v143 = vld [vmem:[%s2 + $0x80] sm:$0xff]
      %v144 = vld [vmem:[%s2 + $0x88] sm:$0xff]
      %v145 = vld [vmem:[%s2 + $0x90] sm:$0xff]
      %v146 = vld [vmem:[%s2 + $0x98] sm:$0xff]
      %v147 = vld [vmem:[%s2 + $0xa0] sm:$0xff]
      %v148 = vld [vmem:[%s2 + $0xa8] sm:$0xff]
      %v149 = vld [vmem:[%s2 + $0xb0] sm:$0xff]
      %v150 = vld [vmem:[%s2 + $0xb8] sm:$0xff]
      %v151 = vld [vmem:[%s2 + $0xc0] sm:$0xff]
      %v152 = vld [vmem:[%s2 + $0xc8] sm:$0xff]
      %v153 = vld [vmem:[%s2 + $0xd0] sm:$0xff]
      %v154 = vld [vmem:[%s2 + $0xd8] sm:$0xff]
      %v155 = vld [vmem:[%s2 + $0xe0] sm:$0xff]
      %v156 = vld [vmem:[%s2 + $0xe8] sm:$0xff]
      %v157 = vld [vmem:[%s2 + $0xf0] sm:$0xff]
      %v158 = vld [vmem:[%s2 + $0xf8] sm:$0xff]
      %159 = vmatprep.subr.mxu0 0.0
      %160 = vmatpush1.msra.mxu0 %v142
      %161 = vmatprep.subr.mxu0 0.0
      %162 = vmatpush1.msra.mxu0 %v141
      %163 = vmatprep.subr.mxu0 0.0
      %164 = vmatpush1.msra.mxu0 %v140
      %165 = vmatprep.subr.mxu0 0.0
      %166 = vmatpush1.msra.mxu0 %v139
      %167 = vmatprep.subr.mxu0 0.0
      %168 = vmatpush1.msra.mxu0 %v138
      %169 = vmatprep.subr.mxu0 0.0
      %170 = vmatpush1.msra.mxu0 %v137
      %171 = vmatprep.subr.mxu0 0.0
      %172 = vmatpush1.msra.mxu0 %v136
      %173 = vmatprep.subr.mxu0 0.0
      %174 = vmatpush1.msra.mxu0 %v135
      %175 = vmatprep.subr.mxu0 0.0
      %176 = vmatpush1.msra.mxu0 %v134
      %177 = vmatprep.subr.mxu0 0.0
      %178 = vmatpush1.msra.mxu0 %v133
      %179 = vmatprep.subr.mxu0 0.0
      %180 = vmatpush1.msra.mxu0 %v132
      %181 = vmatprep.subr.mxu0 0.0
      %182 = vmatpush1.msra.mxu0 %v131
      %183 = vmatprep.subr.mxu0 0.0
      %184 = vmatpush1.msra.mxu0 %v130
      %185 = vmatprep.subr.mxu0 0.0
      %186 = vmatpush1.msra.mxu0 %v129
      %187 = vmatprep.subr.mxu0 0.0
      %188 = vmatpush1.msra.mxu0 %v128
      %189 = vmatprep.subr.mxu0 0.0
      %190 = vmatpush1.msra.mxu0 %v127
      %191 = vmatprep.subr.mxu0 0.0
      %192 = vmatpush2.msra.mxu0 %v158
      %193 = vmatprep.subr.mxu0 0.0
      %194 = vmatpush2.msra.mxu0 %v157
      %195 = vmatprep.subr.mxu0 0.0
      %196 = vmatpush2.msra.mxu0 %v156
      %197 = vmatprep.subr.mxu0 0.0
      %198 = vmatpush2.msra.mxu0 %v155
      %199 = vmatprep.subr.mxu0 0.0
      %200 = vmatpush2.msra.mxu0 %v154
      %201 = vmatprep.subr.mxu0 0.0
      %202 = vmatpush2.msra.mxu0 %v153
      %203 = vmatprep.subr.mxu0 0.0
      %204 = vmatpush2.msra.mxu0 %v152
      %205 = vmatprep.subr.mxu0 0.0
      %206 = vmatpush2.msra.mxu0 %v151
      %207 = vmatprep.subr.mxu0 0.0
      %208 = vmatpush2.msra.mxu0 %v150
      %209 = vmatprep.subr.mxu0 0.0
      %210 = vmatpush2.msra.mxu0 %v149
      %211 = vmatprep.subr.mxu0 0.0
      %212 = vmatpush2.msra.mxu0 %v148
      %213 = vmatprep.subr.mxu0 0.0
      %214 = vmatpush2.msra.mxu0 %v147
      %215 = vmatprep.subr.mxu0 0.0
      %216 = vmatpush2.msra.mxu0 %v146
      %217 = vmatprep.subr.mxu0 0.0
      %218 = vmatpush2.msra.mxu0 %v145
      %219 = vmatprep.subr.mxu0 0.0
      %220 = vmatpush2.msra.mxu0 %v144
      %221 = vmatprep.subr.mxu0 0.0
      %222 = vmatpush2.msra.mxu0 %v143
      %223 = vmatprep.mubr.f32.mxu0 %v64
      %224 = vmatmul.mubr.f32.gmra.mxu0 %v63
      %v225 = vpop.f32.mrf.mxu0
      %v226 = vadd.f32 0.0, %v225
      %v227 = vpop.f32.mrf.mxu0
      %228 = vmatprep.mubr.f32.mxu0 %v66
      %229 = vmatmul.mubr.f32.gmra.mxu0 %v65
      %v230 = vpop.f32.mrf.mxu0
      %v231 = vadd.f32 0.0, %v230
      %v232 = vpop.f32.mrf.mxu0
      %233 = vmatprep.mubr.f32.mxu0 %v68
      %234 = vmatmul.mubr.f32.gmra.mxu0 %v67
      %v235 = vpop.f32.mrf.mxu0
      %v236 = vadd.f32 0.0, %v235
      %v237 = vpop.f32.mrf.mxu0
      %238 = vmatprep.mubr.f32.mxu0 %v70
      %239 = vmatmul.mubr.f32.gmra.mxu0 %v69
      %v240 = vpop.f32.mrf.mxu0
      %v241 = vadd.f32 0.0, %v240
      %v242 = vpop.f32.mrf.mxu0
      %243 = vmatprep.mubr.f32.mxu0 %v72
      %244 = vmatmul.mubr.f32.gmra.mxu0 %v71
      %v245 = vpop.f32.mrf.mxu0
      %v246 = vadd.f32 0.0, %v245
      %v247 = vpop.f32.mrf.mxu0
      %248 = vmatprep.mubr.f32.mxu0 %v74
      %249 = vmatmul.mubr.f32.gmra.mxu0 %v73
      %v250 = vpop.f32.mrf.mxu0
      %v251 = vadd.f32 0.0, %v250
      %v252 = vpop.f32.mrf.mxu0
      %253 = vmatprep.mubr.f32.mxu0 %v76
      %254 = vmatmul.mubr.f32.gmra.mxu0 %v75
      %v255 = vpop.f32.mrf.mxu0
      %v256 = vadd.f32 0.0, %v255
      %v257 = vpop.f32.mrf.mxu0
      %258 = vmatprep.mubr.f32.mxu0 %v78
      %259 = vmatmul.mubr.f32.gmra.mxu0 %v77
      %v260 = vpop.f32.mrf.mxu0
      %v261 = vadd.f32 0.0, %v260
      %v262 = vpop.f32.mrf.mxu0
      %263 = vmatprep.mubr.f32.mxu0 %v80
      %264 = vmatmul.mubr.f32.gmra.mxu0 %v79
      %v265 = vpop.f32.mrf.mxu0
      %v266 = vadd.f32 0.0, %v265
      %v267 = vpop.f32.mrf.mxu0
      %268 = vmatprep.mubr.f32.mxu0 %v82
      %269 = vmatmul.mubr.f32.gmra.mxu0 %v81
      %v270 = vpop.f32.mrf.mxu0
      %v271 = vadd.f32 0.0, %v270
      %v272 = vpop.f32.mrf.mxu0
      %273 = vmatprep.mubr.f32.mxu0 %v84
      %274 = vmatmul.mubr.f32.gmra.mxu0 %v83
      %v275 = vpop.f32.mrf.mxu0
      %v276 = vadd.f32 0.0, %v275
      %v277 = vpop.f32.mrf.mxu0
      %278 = vmatprep.mubr.f32.mxu0 %v86
      %279 = vmatmul.mubr.f32.gmra.mxu0 %v85
      %v280 = vpop.f32.mrf.mxu0
      %v281 = vadd.f32 0.0, %v280
      %v282 = vpop.f32.mrf.mxu0
      %283 = vmatprep.mubr.f32.mxu0 %v88
      %284 = vmatmul.mubr.f32.gmra.mxu0 %v87
      %v285 = vpop.f32.mrf.mxu0
      %v286 = vadd.f32 0.0, %v285
      %v287 = vpop.f32.mrf.mxu0
      %288 = vmatprep.mubr.f32.mxu0 %v90
      %289 = vmatmul.mubr.f32.gmra.mxu0 %v89
      %v290 = vpop.f32.mrf.mxu0
      %v291 = vadd.f32 0.0, %v290
      %v292 = vpop.f32.mrf.mxu0
      %293 = vmatprep.mubr.f32.mxu0 %v92
      %294 = vmatmul.mubr.f32.gmra.mxu0 %v91
      %v295 = vpop.f32.mrf.mxu0
      %v296 = vadd.f32 0.0, %v295
      %v297 = vpop.f32.mrf.mxu0
      %298 = vmatprep.mubr.f32.mxu0 %v94
      %299 = vmatmul.mubr.f32.gmra.mxu0 %v93
      %v300 = vpop.f32.mrf.mxu0
      %v301 = vadd.f32 0.0, %v300
      %v302 = vpop.f32.mrf.mxu0
      %303 = vmatprep.mubr.f32.mxu0 %v96
      %304 = vmatmul.mubr.f32.gmra.mxu0 %v95
      %v305 = vpop.f32.mrf.mxu0
      %v306 = vadd.f32 0.0, %v305
      %v307 = vpop.f32.mrf.mxu0
      %308 = vmatprep.mubr.f32.mxu0 %v98
      %309 = vmatmul.mubr.f32.gmra.mxu0 %v97
      %v310 = vpop.f32.mrf.mxu0
      %v311 = vadd.f32 0.0, %v310
      %v312 = vpop.f32.mrf.mxu0
      %313 = vmatprep.mubr.f32.mxu0 %v100
      %314 = vmatmul.mubr.f32.gmra.mxu0 %v99
      %v315 = vpop.f32.mrf.mxu0
      %v316 = vadd.f32 0.0, %v315
      %v317 = vpop.f32.mrf.mxu0
      %318 = vmatprep.mubr.f32.mxu0 %v102
      %319 = vmatmul.mubr.f32.gmra.mxu0 %v101
      %v320 = vpop.f32.mrf.mxu0
      %v321 = vadd.f32 0.0, %v320
      %v322 = vpop.f32.mrf.mxu0
      %323 = vmatprep.mubr.f32.mxu0 %v104
      %324 = vmatmul.mubr.f32.gmra.mxu0 %v103
      %v325 = vpop.f32.mrf.mxu0
      %v326 = vadd.f32 0.0, %v325
      %v327 = vpop.f32.mrf.mxu0
      %328 = vmatprep.mubr.f32.mxu0 %v106
      %329 = vmatmul.mubr.f32.gmra.mxu0 %v105
      %v330 = vpop.f32.mrf.mxu0
      %v331 = vadd.f32 0.0, %v330
      %v332 = vpop.f32.mrf.mxu0
      %333 = vmatprep.mubr.f32.mxu0 %v108
      %334 = vmatmul.mubr.f32.gmra.mxu0 %v107
      %v335 = vpop.f32.mrf.mxu0
      %v336 = vadd.f32 0.0, %v335
      %v337 = vpop.f32.mrf.mxu0
      %338 = vmatprep.mubr.f32.mxu0 %v110
      %339 = vmatmul.mubr.f32.gmra.mxu0 %v109
      %v340 = vpop.f32.mrf.mxu0
      %v341 = vadd.f32 0.0, %v340
      %v342 = vpop.f32.mrf.mxu0
      %343 = vmatprep.mubr.f32.mxu0 %v112
      %344 = vmatmul.mubr.f32.gmra.mxu0 %v111
      %v345 = vpop.f32.mrf.mxu0
      %v346 = vadd.f32 0.0, %v345
      %v347 = vpop.f32.mrf.mxu0
      %348 = vmatprep.mubr.f32.mxu0 %v114
      %349 = vmatmul.mubr.f32.gmra.mxu0 %v113
      %v350 = vpop.f32.mrf.mxu0
      %v351 = vadd.f32 0.0, %v350
      %v352 = vpop.f32.mrf.mxu0
      %353 = vmatprep.mubr.f32.mxu0 %v116
      %354 = vmatmul.mubr.f32.gmra.mxu0 %v115
      %v355 = vpop.f32.mrf.mxu0
      %v356 = vadd.f32 0.0, %v355
      %v357 = vpop.f32.mrf.mxu0
      %358 = vmatprep.mubr.f32.mxu0 %v118
      %359 = vmatmul.mubr.f32.gmra.mxu0 %v117
      %v360 = vpop.f32.mrf.mxu0
      %v361 = vadd.f32 0.0, %v360
      %v362 = vpop.f32.mrf.mxu0
      %363 = vmatprep.mubr.f32.mxu0 %v120
      %364 = vmatmul.mubr.f32.gmra.mxu0 %v119
      %v365 = vpop.f32.mrf.mxu0
      %v366 = vadd.f32 0.0, %v365
      %v367 = vpop.f32.mrf.mxu0
      %368 = vmatprep.mubr.f32.mxu0 %v122
      %369 = vmatmul.mubr.f32.gmra.mxu0 %v121
      %v370 = vpop.f32.mrf.mxu0
      %v371 = vadd.f32 0.0, %v370
      %v372 = vpop.f32.mrf.mxu0
      %373 = vmatprep.mubr.f32.mxu0 %v124
      %374 = vmatmul.mubr.f32.gmra.mxu0 %v123
      %v375 = vpop.f32.mrf.mxu0
      %v376 = vadd.f32 0.0, %v375
      %v377 = vpop.f32.mrf.mxu0
      %378 = vmatprep.mubr.f32.mxu0 %v126
      %379 = vmatmul.mubr.f32.gmra.mxu0 %v125
      %v380 = vpop.f32.mrf.mxu0
      %v381 = vadd.f32 0.0, %v380
      %v382 = vpop.f32.mrf.mxu0
      %383 = vdwg.mxu0
      %v384 = vmax.f32 %v226, 0.0
      %v385 = vmax.f32 %v231, 0.0
      %v386 = vmax.f32 %v236, 0.0
      %v387 = vmax.f32 %v241, 0.0
      %v388 = vmax.f32 %v246, 0.0
      %v389 = vmax.f32 %v251, 0.0
      %v390 = vmax.f32 %v256, 0.0
      %v391 = vmax.f32 %v261, 0.0
      %v392 = vmax.f32 %v266, 0.0
      %v393 = vmax.f32 %v271, 0.0
      %v394 = vmax.f32 %v276, 0.0
      %v395 = vmax.f32 %v281, 0.0
      %v396 = vmax.f32 %v286, 0.0
      %v397 = vmax.f32 %v291, 0.0
      %v398 = vmax.f32 %v296, 0.0
      %v399 = vmax.f32 %v301, 0.0
      %v400 = vmax.f32 %v306, 0.0
      %v401 = vmax.f32 %v311, 0.0
      %v402 = vmax.f32 %v316, 0.0
      %v403 = vmax.f32 %v321, 0.0
      %v404 = vmax.f32 %v326, 0.0
      %v405 = vmax.f32 %v331, 0.0
      %v406 = vmax.f32 %v336, 0.0
      %v407 = vmax.f32 %v341, 0.0
      %v408 = vmax.f32 %v346, 0.0
      %v409 = vmax.f32 %v351, 0.0
      %v410 = vmax.f32 %v356, 0.0
      %v411 = vmax.f32 %v361, 0.0
      %v412 = vmax.f32 %v366, 0.0
      %v413 = vmax.f32 %v371, 0.0
      %v414 = vmax.f32 %v376, 0.0
      %v415 = vmax.f32 %v381, 0.0
      %vm416 = vcmask 261120
      %417 = vst.msk [vmem:[#allocation2] sm:$0xff] %vm416, %v384
      %418 = vst.msk [vmem:[#allocation2 + $0x8] sm:$0xff] %vm416, %v385
      %419 = vst.msk [vmem:[#allocation2 + $0x10] sm:$0xff] %vm416, %v386
      %420 = vst.msk [vmem:[#allocation2 + $0x18] sm:$0xff] %vm416, %v387
      %421 = vst.msk [vmem:[#allocation2 + $0x20] sm:$0xff] %vm416, %v388
      %422 = vst.msk [vmem:[#allocation2 + $0x28] sm:$0xff] %vm416, %v389
      %423 = vst.msk [vmem:[#allocation2 + $0x30] sm:$0xff] %vm416, %v390
      %424 = vst.msk [vmem:[#allocation2 + $0x38] sm:$0xff] %vm416, %v391
      %425 = vst.msk [vmem:[#allocation2 + $0x40] sm:$0xff] %vm416, %v392
      %426 = vst.msk [vmem:[#allocation2 + $0x48] sm:$0xff] %vm416, %v393
      %427 = vst.msk [vmem:[#allocation2 + $0x50] sm:$0xff] %vm416, %v394
      %428 = vst.msk [vmem:[#allocation2 + $0x58] sm:$0xff] %vm416, %v395
      %429 = vst.msk [vmem:[#allocation2 + $0x60] sm:$0xff] %vm416, %v396
      %430 = vst.msk [vmem:[#allocation2 + $0x68] sm:$0xff] %vm416, %v397
      %431 = vst.msk [vmem:[#allocation2 + $0x70] sm:$0xff] %vm416, %v398
      %432 = vst.msk [vmem:[#allocation2 + $0x78] sm:$0xff] %vm416, %v399
      %433 = vst.msk [vmem:[#allocation2 + $0x80] sm:$0xff] %vm416, %v400
      %434 = vst.msk [vmem:[#allocation2 + $0x88] sm:$0xff] %vm416, %v401
      %435 = vst.msk [vmem:[#allocation2 + $0x90] sm:$0xff] %vm416, %v402
      %436 = vst.msk [vmem:[#allocation2 + $0x98] sm:$0xff] %vm416, %v403
      %437 = vst.msk [vmem:[#allocation2 + $0xa0] sm:$0xff] %vm416, %v404
      %438 = vst.msk [vmem:[#allocation2 + $0xa8] sm:$0xff] %vm416, %v405
      %439 = vst.msk [vmem:[#allocation2 + $0xb0] sm:$0xff] %vm416, %v406
      %440 = vst.msk [vmem:[#allocation2 + $0xb8] sm:$0xff] %vm416, %v407
      %441 = vst.msk [vmem:[#allocation2 + $0xc0] sm:$0xff] %vm416, %v408
      %442 = vst.msk [vmem:[#allocation2 + $0xc8] sm:$0xff] %vm416, %v409
      %443 = vst.msk [vmem:[#allocation2 + $0xd0] sm:$0xff] %vm416, %v410
      %444 = vst.msk [vmem:[#allocation2 + $0xd8] sm:$0xff] %vm416, %v411
      %445 = vst.msk [vmem:[#allocation2 + $0xe0] sm:$0xff] %vm416, %v412
      %446 = vst.msk [vmem:[#allocation2 + $0xe8] sm:$0xff] %vm416, %v413
      %447 = vst.msk [vmem:[#allocation2 + $0xf0] sm:$0xff] %vm416, %v414
      %448 = vst.msk [vmem:[#allocation2 + $0xf8] sm:$0xff] %vm416, %v415
    $region25: #{neat_vanilla_forward.1} parent=1 // pred_fallthru
      _
    %v449 = vld [vmem:[%s54] sm:$0xff]
    %v450 = vld [vmem:[%s54 + $0x8] sm:$0xff]
    %v451 = vld [vmem:[%s54 + $0x10] sm:$0xff]
    %v452 = vld [vmem:[%s54 + $0x18] sm:$0xff]
    %v453 = vld [vmem:[#allocation2] sm:$0xff]
    %v454 = vld [vmem:[#allocation2 + $0x8] sm:$0xff]
    %v455 = vld [vmem:[#allocation2 + $0x10] sm:$0xff]
    %v456 = vld [vmem:[#allocation2 + $0x18] sm:$0xff]
    %v457 = vld [vmem:[#allocation2 + $0x20] sm:$0xff]
    %v458 = vld [vmem:[#allocation2 + $0x28] sm:$0xff]
    %v459 = vld [vmem:[#allocation2 + $0x30] sm:$0xff]
    %v460 = vld [vmem:[#allocation2 + $0x38] sm:$0xff]
    %v461 = vld [vmem:[#allocation2 + $0x40] sm:$0xff]
    %v462 = vld [vmem:[#allocation2 + $0x48] sm:$0xff]
    %v463 = vld [vmem:[#allocation2 + $0x50] sm:$0xff]
    %v464 = vld [vmem:[#allocation2 + $0x58] sm:$0xff]
    %v465 = vld [vmem:[#allocation2 + $0x60] sm:$0xff]
    %v466 = vld [vmem:[#allocation2 + $0x68] sm:$0xff]
    %v467 = vld [vmem:[#allocation2 + $0x70] sm:$0xff]
    %v468 = vld [vmem:[#allocation2 + $0x78] sm:$0xff]
    %v469 = vld [vmem:[#allocation2 + $0x80] sm:$0xff]
    %v470 = vld [vmem:[#allocation2 + $0x88] sm:$0xff]
    %v471 = vld [vmem:[#allocation2 + $0x90] sm:$0xff]
    %v472 = vld [vmem:[#allocation2 + $0x98] sm:$0xff]
    %v473 = vld [vmem:[#allocation2 + $0xa0] sm:$0xff]
    %v474 = vld [vmem:[#allocation2 + $0xa8] sm:$0xff]
    %v475 = vld [vmem:[#allocation2 + $0xb0] sm:$0xff]
    %v476 = vld [vmem:[#allocation2 + $0xb8] sm:$0xff]
    %v477 = vld [vmem:[#allocation2 + $0xc0] sm:$0xff]
    %v478 = vld [vmem:[#allocation2 + $0xc8] sm:$0xff]
    %v479 = vld [vmem:[#allocation2 + $0xd0] sm:$0xff]
    %v480 = vld [vmem:[#allocation2 + $0xd8] sm:$0xff]
    %v481 = vld [vmem:[#allocation2 + $0xe0] sm:$0xff]
    %v482 = vld [vmem:[#allocation2 + $0xe8] sm:$0xff]
    %v483 = vld [vmem:[#allocation2 + $0xf0] sm:$0xff]
    %v484 = vld [vmem:[#allocation2 + $0xf8] sm:$0xff]
    %485 = vmatprep.subr.mxu0 0.0
    %486 = vmatpush1.msra.mxu0 %v468
    %487 = vmatprep.subr.mxu0 0.0
    %488 = vmatpush1.msra.mxu0 %v467
    %489 = vmatprep.subr.mxu0 0.0
    %490 = vmatpush1.msra.mxu0 %v466
    %491 = vmatprep.subr.mxu0 0.0
    %492 = vmatpush1.msra.mxu0 %v465
    %493 = vmatprep.subr.mxu0 0.0
    %494 = vmatpush1.msra.mxu0 %v464
    %495 = vmatprep.subr.mxu0 0.0
    %496 = vmatpush1.msra.mxu0 %v463
    %497 = vmatprep.subr.mxu0 0.0
    %498 = vmatpush1.msra.mxu0 %v462
    %499 = vmatprep.subr.mxu0 0.0
    %500 = vmatpush1.msra.mxu0 %v461
    %501 = vmatprep.subr.mxu0 0.0
    %502 = vmatpush1.msra.mxu0 %v460
    %503 = vmatprep.subr.mxu0 0.0
    %504 = vmatpush1.msra.mxu0 %v459
    %505 = vmatprep.subr.mxu0 0.0
    %506 = vmatpush1.msra.mxu0 %v458
    %507 = vmatprep.subr.mxu0 0.0
    %508 = vmatpush1.msra.mxu0 %v457
    %509 = vmatprep.subr.mxu0 0.0
    %510 = vmatpush1.msra.mxu0 %v456
    %511 = vmatprep.subr.mxu0 0.0
    %512 = vmatpush1.msra.mxu0 %v455
    %513 = vmatprep.subr.mxu0 0.0
    %514 = vmatpush1.msra.mxu0 %v454
    %515 = vmatprep.subr.mxu0 0.0
    %516 = vmatpush1.msra.mxu0 %v453
    %517 = vmatprep.subr.mxu0 0.0
    %518 = vmatpush2.msra.mxu0 %v484
    %519 = vmatprep.subr.mxu0 0.0
    %520 = vmatpush2.msra.mxu0 %v483
    %521 = vmatprep.subr.mxu0 0.0
    %522 = vmatpush2.msra.mxu0 %v482
    %523 = vmatprep.subr.mxu0 0.0
    %524 = vmatpush2.msra.mxu0 %v481
    %525 = vmatprep.subr.mxu0 0.0
    %526 = vmatpush2.msra.mxu0 %v480
    %527 = vmatprep.subr.mxu0 0.0
    %528 = vmatpush2.msra.mxu0 %v479
    %529 = vmatprep.subr.mxu0 0.0
    %530 = vmatpush2.msra.mxu0 %v478
    %531 = vmatprep.subr.mxu0 0.0
    %532 = vmatpush2.msra.mxu0 %v477
    %533 = vmatprep.subr.mxu0 0.0
    %534 = vmatpush2.msra.mxu0 %v476
    %535 = vmatprep.subr.mxu0 0.0
    %536 = vmatpush2.msra.mxu0 %v475
    %537 = vmatprep.subr.mxu0 0.0
    %538 = vmatpush2.msra.mxu0 %v474
    %539 = vmatprep.subr.mxu0 0.0
    %540 = vmatpush2.msra.mxu0 %v473
    %541 = vmatprep.subr.mxu0 0.0
    %542 = vmatpush2.msra.mxu0 %v472
    %543 = vmatprep.subr.mxu0 0.0
    %544 = vmatpush2.msra.mxu0 %v471
    %545 = vmatprep.subr.mxu0 0.0
    %546 = vmatpush2.msra.mxu0 %v470
    %547 = vmatprep.subr.mxu0 0.0
    %548 = vmatpush2.msra.mxu0 %v469
    %549 = vmatprep.mubr.f32.mxu0 %v450
    %550 = vmatmul.mubr.f32.gmra.mxu0 %v449
    %v551 = vpop.f32.mrf.mxu0
    %v552 = vadd.f32 0.0, %v551
    %v553 = vpop.f32.mrf.mxu0
    %554 = vmatprep.mubr.f32.mxu0 %v452
    %555 = vmatmul.mubr.f32.gmra.mxu0 %v451
    %v556 = vpop.f32.mrf.mxu0
    %v557 = vadd.f32 0.0, %v556
    %v558 = vpop.f32.mrf.mxu0
    %559 = vdwg.mxu0
    %v560 = vld [vmem:[%s3] sm:$0xff]
    %v561 = vld [vmem:[%s3 + $0x8] sm:$0xff]
    %v562 = vld [vmem:[%s3 + $0x10] sm:$0xff]
    %v563 = vld [vmem:[%s3 + $0x18] sm:$0xff]
    %v564 = vld [vmem:[%s3 + $0x20] sm:$0xff]
    %v565 = vld [vmem:[%s3 + $0x28] sm:$0xff]
    %v566 = vld [vmem:[%s3 + $0x30] sm:$0xff]
    %v567 = vld [vmem:[%s3 + $0x38] sm:$0xff]
    %vm568 = vcmask 261120
    %v570 = vsel %vm568, %v552, 0
    %v573 = vsel %vm568, %v557, 0
    %575 = vmatprep.subr.mxu0 0.0
    %576 = vmatpush1.msra.mxu0 0.0
    %577 = vmatprep.subr.mxu0 0.0
    %578 = vmatpush1.msra.mxu0 0.0
    %579 = vmatprep.subr.mxu0 0.0
    %580 = vmatpush1.msra.mxu0 0.0
    %581 = vmatprep.subr.mxu0 0.0
    %582 = vmatpush1.msra.mxu0 0.0
    %583 = vmatprep.subr.mxu0 0.0
    %584 = vmatpush1.msra.mxu0 0.0
    %585 = vmatprep.subr.mxu0 0.0
    %586 = vmatpush1.msra.mxu0 0.0
    %587 = vmatprep.subr.mxu0 0.0
    %588 = vmatpush1.msra.mxu0 0.0
    %589 = vmatprep.subr.mxu0 0.0
    %590 = vmatpush1.msra.mxu0 0.0
    %591 = vmatprep.subr.mxu0 0.0
    %592 = vmatpush1.msra.mxu0 0.0
    %593 = vmatprep.subr.mxu0 0.0
    %594 = vmatpush1.msra.mxu0 0.0
    %595 = vmatprep.subr.mxu0 0.0
    %596 = vmatpush1.msra.mxu0 0.0
    %597 = vmatprep.subr.mxu0 0.0
    %598 = vmatpush1.msra.mxu0 0.0
    %599 = vmatprep.subr.mxu0 %v567
    %600 = vmatpush1.msra.mxu0 %v566
    %601 = vmatprep.subr.mxu0 %v565
    %602 = vmatpush1.msra.mxu0 %v564
    %603 = vmatprep.subr.mxu0 %v563
    %604 = vmatpush1.msra.mxu0 %v562
    %605 = vmatprep.subr.mxu0 %v561
    %606 = vmatpush1.msra.mxu0 %v560
    %607 = vmatprep.subr.mxu0 0.0
    %608 = vmatpush2.msra.mxu0 0.0
    %609 = vmatprep.subr.mxu0 0.0
    %610 = vmatpush2.msra.mxu0 0.0
    %611 = vmatprep.subr.mxu0 0.0
    %612 = vmatpush2.msra.mxu0 0.0
    %613 = vmatprep.subr.mxu0 0.0
    %614 = vmatpush2.msra.mxu0 0.0
    %615 = vmatprep.subr.mxu0 0.0
    %616 = vmatpush2.msra.mxu0 0.0
    %617 = vmatprep.subr.mxu0 0.0
    %618 = vmatpush2.msra.mxu0 0.0
    %619 = vmatprep.subr.mxu0 0.0
    %620 = vmatpush2.msra.mxu0 0.0
    %621 = vmatprep.subr.mxu0 0.0
    %622 = vmatpush2.msra.mxu0 0.0
    %623 = vmatprep.subr.mxu0 0.0
    %624 = vmatpush2.msra.mxu0 0.0
    %625 = vmatprep.subr.mxu0 0.0
    %626 = vmatpush2.msra.mxu0 0.0
    %627 = vmatprep.subr.mxu0 0.0
    %628 = vmatpush2.msra.mxu0 0.0
    %629 = vmatprep.subr.mxu0 0.0
    %630 = vmatpush2.msra.mxu0 0.0
    %631 = vmatprep.subr.mxu0 0.0
    %632 = vmatpush2.msra.mxu0 0.0
    %633 = vmatprep.subr.mxu0 0.0
    %634 = vmatpush2.msra.mxu0 0.0
    %635 = vmatprep.subr.mxu0 0.0
    %636 = vmatpush2.msra.mxu0 0.0
    %637 = vmatprep.subr.mxu0 0.0
    %638 = vmatpush2.msra.mxu0 0.0
    %639 = vmatprep.mubr.f32.mxu0 0.0
    %640 = vmatmul.mubr.f32.gmra.mxu0 %v570
    %v641 = vpop.f32.mrf.mxu0
    %v642 = vadd.f32 0.0, %v641
    %v643 = vpop.f32.mrf.mxu0
    %v644 = vadd.f32 0.0, %v643
    %645 = vmatprep.mubr.f32.mxu0 0.0
    %646 = vmatmul.mubr.f32.gmra.mxu0 %v573
    %v647 = vpop.f32.mrf.mxu0
    %v648 = vadd.f32 0.0, %v647
    %v649 = vpop.f32.mrf.mxu0
    %v650 = vadd.f32 0.0, %v649
    %651 = vdwg.mxu0
    %652 = vst [vmem:[#allocation6] sm:$0xff] %v642
    %653 = vst [vmem:[#allocation6 + $0x8] sm:$0xff] %v644
    %654 = vst [vmem:[#allocation6 + $0x10] sm:$0xff] %v648
    %655 = vst [vmem:[#allocation6 + $0x18] sm:$0xff] %v650
    // Predicated region
    $region26: #{neat_vanilla_forward.1} parent=1 // pred_check
      _
    $region27: #{neat_vanilla_forward.1} parent=1 // pred_check_branch
      %657 = sbr.rel (0) target = $region29
    $region28: #{neat_vanilla_forward.1} parent=1 // pred_region
      %s658 = sadd.s32 0, 0
      %s659 = smul.u32 2, %s658
      %s661 = ssub.s32 512, 512
      %662 = vsyncadd [#allocation5], %s661
      %s663 = smul.addr %s659, 2
      %s664 = smul.addr %s663, 128
      %s665 = scalar_lea.hbm %s4, %s664
      %s666 = sshll.u32 [#allocation6], 4
      %s667 = int_to_ptr.vmem [resolvable:$true] %s666
      %672 = dma.vmem_to_hbm [thread:$0]  %s667, 512, %s665, [#allocation5], 256, 256, 16
    $region29: #{neat_vanilla_forward.1} parent=1 // pred_fallthru
      _
    // Predicated region
    $region30: #{neat_vanilla_forward.1} parent=1 // pred_check
      _
    $region31: #{neat_vanilla_forward.1} parent=1 // pred_check_branch
      %674 = sbr.rel (0) target = $region33
    $region32: #{neat_vanilla_forward.1} parent=1 // pred_region
      %675 = dma.done [#allocation5], 512
    $region33: #{neat_vanilla_forward.1} parent=1 // pred_fallthru
      _
    %676 = vsyncpa [#allocation4], 1
    %677 = vsyncpa [#allocation5], 1

</llo_original>
